<compile_context>
chip_gen: v7x
topology: tpu7x:2x2x1
jax: 0.10.0
libtpu: 0.0.40
codegen_flags: <defaults>
</compile_context>

<pallas_src>
import jax
import jax.numpy as jnp
from jax import lax
from jax.experimental import pallas as pl
from jax.experimental.pallas import tpu as pltpu
import numpy as np


def linear_downstream_kernel(len_ref,   # VMEM (Tb, 1, 1) int32   per-sample valid lengths
                             x_ref,     # VMEM (Tb, T, L*H) bf16  flattened upstream features
                             w_ref,     # VMEM (L*H, Do) f32      softmax(ws)*proj folded into head
                             c_ref,     # VMEM (1, Do)  f32       proj_b @ head_w + head_b
                             out_ref):  # VMEM (Tb, 1, Do) f32
    Tb, T, _ = x_ref.shape

    lens = len_ref[...]                                           # (Tb, 1, 1) int32
    # Masked-mean scale: scale[b, t] = (t < len_b) / len_b.  Guard len == 0
    # (the PyTorch reference would produce NaN for an empty slice).
    inv_len = 1.0 / jnp.maximum(lens, 1).astype(jnp.float32)      # (Tb, 1, 1) f32
    t_idx = lax.broadcasted_iota(jnp.int32, (Tb, T, 1), 1)
    scale = jnp.where(t_idx < lens, inv_len, 0.0)                 # (Tb, T, 1) f32

    # Length-masked mean over time.  VPU math in f32; only the HBM copy of x is bf16.
    x = x_ref[...].astype(jnp.float32)                            # (Tb, T, K)
    pooled = jnp.sum(x * scale, axis=1)                           # (Tb, K)

    # Folded (weighted-sum -> proj -> head) applied to the pooled features.
    out = jnp.dot(pooled, w_ref[...],
                  preferred_element_type=jnp.float32) + c_ref[...]  # (Tb, Do)
    out_ref[...] = out[:, None, :]


def linear_downstream(x, lengths, params, *, block_b=None, x_dtype=jnp.bfloat16):
    """x: (B, T, L, H) float32, lengths: (B,) int. Returns (B, Do) float32."""
    B, T, L, H = x.shape
    K = L * H

    # Fold WeightedSumLayer + proj + head (all linear, pooling is linear too):
    #   mean_t(ws(x) @ Pw + Pb) @ Hw + Hb == mean_t(x_flat) @ (Wc @ Hw) + (Pb @ Hw + Hb)
    # with Wc = (softmax(ws)[:,None,None] * Pw).reshape(L*H, Dh).
    ws = jax.nn.softmax(params["ws_weight"].astype(jnp.float32))
    Wc = (ws[:, None, None] * params["proj_w"]).reshape(K, -1)        # (K, Dh)
    W_total = (Wc @ params["head_w"]).astype(jnp.float32)             # (K, Do)
    c = (params["proj_b"] @ params["head_w"] + params["head_b"])
    c = c.reshape(1, -1).astype(jnp.float32)                          # (1, Do)
    Do = W_total.shape[1]

    # Batch tile: big enough to amortize the ~0.35us/step overhead, but keep >= 2 grid
    # steps so the parallel axis can be split across TensorCores on v7x.
    # VMEM per step ~ 2 (double-buffer) * block_b*T*K*2B for x + tiny weights; shrink
    # block_b for very long T to stay well under v7x's 64 MiB physical VMEM.
    if block_b is None:
        block_b = min(B, 32)
        if B > 1 and pl.cdiv(B, block_b) < 2:
            block_b = pl.cdiv(B, 2)
    n_blocks = pl.cdiv(B, block_b)
    Bp = n_blocks * block_b

    # x is the dominant HBM traffic -> bf16 halves it; everything else stays f32.
    x_flat = x.reshape(B, T, K).astype(x_dtype)
    lens = lengths.astype(jnp.int32).reshape(B, 1, 1)
    if Bp != B:
        x_flat = jnp.pad(x_flat, ((0, Bp - B), (0, 0), (0, 0)))
        lens = jnp.pad(lens, ((0, Bp - B), (0, 0), (0, 0)), constant_values=1)

    grid_spec = pltpu.PrefetchScalarGridSpec(
        num_scalar_prefetch=0,
        grid=(n_blocks,),
        in_specs=[
            pl.BlockSpec((block_b, 1, 1), lambda b: (b, 0, 0)),
            pl.BlockSpec((block_b, T, K), lambda b: (b, 0, 0)),
            pl.BlockSpec((K, Do), lambda b: (0, 0)),
            pl.BlockSpec((1, Do), lambda b: (0, 0)),
        ],
        out_specs=pl.BlockSpec((block_b, 1, Do), lambda b: (b, 0, 0)),
    )

    out = pl.pallas_call(
        linear_downstream_kernel,
        out_shape=jax.ShapeDtypeStruct((Bp, 1, Do), jnp.float32),
        grid_spec=grid_spec,
        compiler_params=pltpu.CompilerParams(
            dimension_semantics=("parallel",)),
    )(lens, x_flat, W_total, c)
    return out.reshape(Bp, Do)[:B]


def reference(x, lengths, params):
    """Pure-JAX f32 reference with the original op order (ws -> proj -> pool -> head)."""
    w = jax.nn.softmax(params["ws_weight"])
    xs = jnp.einsum("btlh,l->bth", x, w)
    h = xs @ params["proj_w"] + params["proj_b"]
    T = x.shape[1]
    mask = (jnp.arange(T)[None, :] < lengths[:, None]).astype(jnp.float32)
    pooled = (h * mask[:, :, None]).sum(axis=1) / lengths[:, None].astype(jnp.float32)
    return pooled @ params["head_w"] + params["head_b"]


def init_params(key, n_in_layers, upstream_dim, d_hidden, d_out):
    k1, k2, k3, k4, k5 = jax.random.split(key, 5)
    bp = 1.0 / np.sqrt(upstream_dim)
    bh = 1.0 / np.sqrt(d_hidden)
    return {
        "ws_weight": jax.random.normal(k1, (n_in_layers,), jnp.float32) * 0.1,
        "proj_w": jax.random.uniform(k2, (upstream_dim, d_hidden), jnp.float32, -bp, bp),
        "proj_b": jax.random.uniform(k3, (d_hidden,), jnp.float32, -bp, bp),
        "head_w": jax.random.uniform(k4, (d_hidden, d_out), jnp.float32, -bh, bh),
        "head_b": jax.random.uniform(k5, (d_out,), jnp.float32, -bh, bh),
    }


if __name__ == "__main__":
    B, T, L, H = 2, 16, 4, 32     # batch, time, n_in_layers, upstream_dim
    Dh, Do = 32, 8                # d_hidden, d_out

    key = jax.random.PRNGKey(0)
    kx, kp = jax.random.split(key)
    x = jax.random.normal(kx, (B, T, L, H), jnp.float32)
    lengths = jnp.array([16, 9], dtype=jnp.int32)
    params = init_params(kp, L, H, Dh, Do)

    out = linear_downstream(x, lengths, params)
    out = jax.block_until_ready(out)

    ref = jax.block_until_ready(reference(x, lengths, params))
    # Relaxed tolerance: x travels as bf16 and the linear layers are algebraically
    # folded, so the kernel matches the f32 reference to float (not bit) accuracy.
    np.testing.assert_allclose(np.asarray(out), np.asarray(ref), rtol=2e-2, atol=2e-3)

    print("KERNEL_OK")
</pallas_src>

<mosaic_0001>
module attributes {stable_mosaic.version = 11 : i64} {
  func.func @linear_downstream_kernel(%arg0: i32, %arg1: memref<1x1x1xi32, #tpu.memory_space<vmem>>, %arg2: memref<1x16x128xbf16, #tpu.memory_space<vmem>>, %arg3: memref<128x8xf32, #tpu.memory_space<vmem>>, %arg4: memref<1x8xf32, #tpu.memory_space<vmem>>, %arg5: memref<1x1x8xf32, #tpu.memory_space<vmem>>) attributes {dimension_semantics = [#tpu.dimension_semantics<parallel>], iteration_bounds = array<i64: 2>, scalar_prefetch = 0 : i64, scratch_operands = 0 : i64, tpu.core_type = #tpu.core_type<tc>, window_params = [{transform_indices = @transform_0, window_bounds = array<i64: 1, 1, 1>}, {transform_indices = @transform_1, window_bounds = array<i64: 1, 16, 128>}, {pipeline_mode = #tpu.pipeline_mode<synchronous>, transform_indices = @transform_2, window_bounds = array<i64: 128, 8>}, {pipeline_mode = #tpu.pipeline_mode<synchronous>, transform_indices = @transform_3, window_bounds = array<i64: 1, 8>}, {transform_indices = @transform_4, window_bounds = array<i64: 1, 1, 8>}]} {
    %c0 = arith.constant 0 : index
    %c0_0 = arith.constant 0 : index
    %c0_1 = arith.constant 0 : index
    %0 = vector.load %arg1[%c0, %c0_0, %c0_1] : memref<1x1x1xi32, #tpu.memory_space<vmem>>, vector<1x1x1xi32>
    %c1_i32 = arith.constant 1 : i32
    %1 = vector.broadcast %c1_i32 : i32 to vector<1x1x1xi32>
    %2 = arith.maxsi %0, %1 : vector<1x1x1xi32>
    %3 = arith.sitofp %2 : vector<1x1x1xi32> to vector<1x1x1xf32>
    %cst = arith.constant 1.000000e+00 : f32
    %4 = vector.broadcast %cst : f32 to vector<1x1x1xf32>
    %5 = arith.divf %4, %3 : vector<1x1x1xf32>
    %6 = tpu.iota {dimensions = array<i32: 1>} : vector<1x16x1xi32>
    %7 = vector.broadcast %0 : vector<1x1x1xi32> to vector<1x16x1xi32>
    %8 = arith.cmpi slt, %6, %7 : vector<1x16x1xi32>
    %cst_2 = arith.constant 0.000000e+00 : f32
    %9 = vector.shape_cast %5 : vector<1x1x1xf32> to vector<1x1x1xf32>
    %10 = vector.broadcast %9 : vector<1x1x1xf32> to vector<1x16x1xf32>
    %11 = vector.broadcast %cst_2 : f32 to vector<1x16x1xf32>
    %12 = arith.select %8, %10, %11 : vector<1x16x1xi1>, vector<1x16x1xf32>
    %c0_3 = arith.constant 0 : index
    %c0_4 = arith.constant 0 : index
    %c0_5 = arith.constant 0 : index
    %13 = vector.load %arg2[%c0_3, %c0_4, %c0_5] : memref<1x16x128xbf16, #tpu.memory_space<vmem>>, vector<1x16x128xbf16>
    %14 = arith.extf %13 : vector<1x16x128xbf16> to vector<1x16x128xf32>
    %15 = vector.broadcast %12 : vector<1x16x1xf32> to vector<1x16x128xf32>
    %16 = arith.mulf %14, %15 : vector<1x16x128xf32>
    %cst_6 = arith.constant dense<0.000000e+00> : vector<1x128xf32>
    %17 = vector.multi_reduction <add>, %16, %cst_6 [1] : vector<1x16x128xf32> to vector<1x128xf32>
    %c0_7 = arith.constant 0 : index
    %c0_8 = arith.constant 0 : index
    %18 = vector.load %arg3[%c0_7, %c0_8] : memref<128x8xf32, #tpu.memory_space<vmem>>, vector<128x8xf32>
    %cst_9 = arith.constant dense<0.000000e+00> : vector<1x8xf32>
    %19 = tpu.matmul %17, %18, %cst_9 {dimension_numbers = #tpu.dot_dimension_numbers<[1], [0], [0], [1], [0, 0, 1, 1], [], []>} : vector<1x128xf32>, vector<128x8xf32>, vector<1x8xf32> -> vector<1x8xf32>
    %c0_10 = arith.constant 0 : index
    %c0_11 = arith.constant 0 : index
    %20 = vector.load %arg4[%c0_10, %c0_11] : memref<1x8xf32, #tpu.memory_space<vmem>>, vector<1x8xf32>
    %21 = arith.addf %19, %20 : vector<1x8xf32>
    %22 = vector.shape_cast %21 : vector<1x8xf32> to vector<1x1x8xf32>
    %c0_12 = arith.constant 0 : index
    %c0_13 = arith.constant 0 : index
    %c0_14 = arith.constant 0 : index
    %23 = vector.load %arg5[%c0_12, %c0_13, %c0_14] : memref<1x1x8xf32, #tpu.memory_space<vmem>>, vector<1x1x8xf32>
    tpu.vector_store %arg5[%c0_12, %c0_13, %c0_14], %22 {strides = array<i32>} : memref<1x1x8xf32, #tpu.memory_space<vmem>>, vector<1x1x8xf32>,
    return
  }
  func.func @transform_0(%arg0: i32) -> (i32, i32, i32) {
    %c0_i32 = arith.constant 0 : i32
    %c0_i32_0 = arith.constant 0 : i32
    %c0_i32_1 = arith.constant 0 : i32
    return %arg0, %c0_i32, %c0_i32_0 : i32, i32, i32
  }
  func.func @transform_1(%arg0: i32) -> (i32, i32, i32) {
    %c0_i32 = arith.constant 0 : i32
    %c0_i32_0 = arith.constant 0 : i32
    %c0_i32_1 = arith.constant 0 : i32
    return %arg0, %c0_i32, %c0_i32_0 : i32, i32, i32
  }
  func.func @transform_2(%arg0: i32) -> (i32, i32) {
    %c0_i32 = arith.constant 0 : i32
    %c0_i32_0 = arith.constant 0 : i32
    %c0_i32_1 = arith.constant 0 : i32
    return %c0_i32, %c0_i32_0 : i32, i32
  }
  func.func @transform_3(%arg0: i32) -> (i32, i32) {
    %c0_i32 = arith.constant 0 : i32
    %c0_i32_0 = arith.constant 0 : i32
    %c0_i32_1 = arith.constant 0 : i32
    return %c0_i32, %c0_i32_0 : i32, i32
  }
  func.func @transform_4(%arg0: i32) -> (i32, i32, i32) {
    %c0_i32 = arith.constant 0 : i32
    %c0_i32_0 = arith.constant 0 : i32
    %c0_i32_1 = arith.constant 0 : i32
    return %arg0, %c0_i32, %c0_i32_0 : i32, i32, i32
  }
}

</mosaic_0001>

<llo_original>
// kernel: tpu_custom_call.1
$region0: #{tpu_custom_call.1}
  #allocation0 [shape = 'u32[]', space=smem, size = 0x4, offset = 0x4, fixed_abs, tag = 'smem constant byte address 0x4 - core index']
  #allocation1 [shape = 'u32[144,128]{1,0:T(1,128)}', space=vmem, size = 0x12000, scoped, tag = 'internal scratch']
  %s0 = inlined_call_operand.vmem [shape: s32[2,1,1], index: 0, kind: input, shape index: {}]
  %s1 = inlined_call_operand.vmem [shape: bf16[2,16,128], index: 1, kind: input, shape index: {}]
  %s2 = inlined_call_operand.vmem [shape: f32[128,8], index: 2, kind: input, shape index: {}]
  %s3 = inlined_call_operand.vmem [shape: f32[1,8], index: 3, kind: input, shape index: {}]
  %s4 = inlined_call_operand.hbm [shape: f32[2,1,8], index: 4, kind: output, shape index: {}]
  %s5 = sld [smem:[#allocation0]]
  $region49: #{tpu_custom_call.1} parent=0
    _
  %s7 = ssub.s32 1, %s5
  %s8 = scalar_select 0, %s7, %s5
  $region1: #{tpu_custom_call.1} parent=0
    #allocation2 [shape = 'u8[1024]{0}', space=vmem, size = 0x400, scoped, tag = 'output window, operand 0']
    #allocation3 [shape = 's32[2]{0}', space=sflag, size = 0x8, scoped, tag = 'scoped memory for tpu_custom_call.1']
    %9 = vsyncpa [#allocation3], 0
    %s10 = scalar_lea.sflag [#allocation3], 1
    %11 = vsyncpa %s10, 0
    loop: start=0, step=1, limit=4
    $region2: #{tpu_custom_call.1} parent=1 // loop_pre_header
      _
    $region3: #{tpu_custom_call.1} parent=1 // loop_header
      %s13 = sphi 0, %s17
      %p14 = scmp.ge.s32.totalorder %s13, 4
      %s23 = sphi 0, %s25
      %s26 = sphi 0, %s23
      %s27 = sphi 0, %s26
      %s43 = sphi 0, %s27
      %s49 = sphi 0, %s51
      %s52 = sphi 0, %s49
      %s53 = sphi 0, %s52
      %s69 = sphi 0, %s53
      %s73 = sphi 0, %s73
      %s75 = sphi 0, %s73
      %s76 = sphi 0, %s75
      %s90 = sphi 0, %s76
      %s94 = sphi 0, %s94
      %s96 = sphi 0, %s94
      %s97 = sphi 0, %s96
      %s111 = sphi 0, %s97
      %s117 = sphi 0, %s119
      %s120 = sphi 0, %s117
      %s121 = sphi 0, %s120
      %s137 = sphi 0, %s121
    $region4: #{tpu_custom_call.1} parent=1 // loop_header_branch
      %16 = sbr.rel (%p14) target = $region8
    $region5: #{tpu_custom_call.1} parent=1 // loop_body
      %s18 = ssub.s32 %s13, 1
      %s19 = ssub.s32 %s13, 2
      %s20 = sadd.s32 %s13, 1
      %s21 = ssub.s32 %s13, %s20
      %p22 = scmp.eq.s32.totalorder %s21, 0
      %s24 = sadd.s32 %s23, 1
      %s25 = scalar_select %p22, %s23, %s24
      %p28 = pneg %p22
      %p29 = scmp.eq.s32.totalorder %s13, 1
      %p30 = por %p28, %p29
      %p31 = scmp.ne.s32.totalorder %s23, %s26
      %p32 = scmp.eq.s32.totalorder %s13, 0
      %p33 = por %p31, %p32
      %p34 = scmp.ne.s32.totalorder %s23, %s26
      %p35 = scmp.eq.s32.totalorder %s18, 1
      %p36 = por %p34, %p35
      %p37 = scmp.ne.s32.totalorder %s26, %s27
      %p38 = scmp.eq.s32.totalorder %s18, 0
      %p39 = por %p37, %p38
      %p40 = scmp.ne.s32.totalorder %s26, %s27
      %p41 = scmp.eq.s32.totalorder %s19, 1
      %p42 = por %p40, %p41
      %p44 = scmp.ne.s32.totalorder %s27, %s43
      %p45 = scmp.eq.s32.totalorder %s19, 0
      %p46 = por %p44, %p45
      %s47 = ssub.s32 %s13, %s20
      %p48 = scmp.eq.s32.totalorder %s47, 0
      %s50 = sadd.s32 %s49, 1
      %s51 = scalar_select %p48, %s49, %s50
      %p54 = pneg %p48
      %p55 = scmp.eq.s32.totalorder %s13, 1
      %p56 = por %p54, %p55
      %p57 = scmp.ne.s32.totalorder %s49, %s52
      %p58 = scmp.eq.s32.totalorder %s13, 0
      %p59 = por %p57, %p58
      %p60 = scmp.ne.s32.totalorder %s49, %s52
      %p61 = scmp.eq.s32.totalorder %s18, 1
      %p62 = por %p60, %p61
      %p63 = scmp.ne.s32.totalorder %s52, %s53
      %p64 = scmp.eq.s32.totalorder %s18, 0
      %p65 = por %p63, %p64
      %p66 = scmp.ne.s32.totalorder %s52, %s53
      %p67 = scmp.eq.s32.totalorder %s19, 1
      %p68 = por %p66, %p67
      %p70 = scmp.ne.s32.totalorder %s53, %s69
      %p71 = scmp.eq.s32.totalorder %s19, 0
      %p72 = por %p70, %p71
      %s74 = sadd.s32 %s73, 1
      %p77 = scmp.eq.s32.totalorder %s13, 1
      %p78 = scmp.ne.s32.totalorder %s73, %s75
      %p79 = scmp.eq.s32.totalorder %s13, 0
      %p80 = por %p78, %p79
      %p81 = scmp.ne.s32.totalorder %s73, %s75
      %p82 = scmp.eq.s32.totalorder %s18, 1
      %p83 = por %p81, %p82
      %p84 = scmp.ne.s32.totalorder %s75, %s76
      %p85 = scmp.eq.s32.totalorder %s18, 0
      %p86 = por %p84, %p85
      %p87 = scmp.ne.s32.totalorder %s75, %s76
      %p88 = scmp.eq.s32.totalorder %s19, 1
      %p89 = por %p87, %p88
      %p91 = scmp.ne.s32.totalorder %s76, %s90
      %p92 = scmp.eq.s32.totalorder %s19, 0
      %p93 = por %p91, %p92
      %s95 = sadd.s32 %s94, 1
      %p98 = scmp.eq.s32.totalorder %s13, 1
      %p99 = scmp.ne.s32.totalorder %s94, %s96
      %p100 = scmp.eq.s32.totalorder %s13, 0
      %p101 = por %p99, %p100
      %p102 = scmp.ne.s32.totalorder %s94, %s96
      %p103 = scmp.eq.s32.totalorder %s18, 1
      %p104 = por %p102, %p103
      %p105 = scmp.ne.s32.totalorder %s96, %s97
      %p106 = scmp.eq.s32.totalorder %s18, 0
      %p107 = por %p105, %p106
      %p108 = scmp.ne.s32.totalorder %s96, %s97
      %p109 = scmp.eq.s32.totalorder %s19, 1
      %p110 = por %p108, %p109
      %p112 = scmp.ne.s32.totalorder %s97, %s111
      %p113 = scmp.eq.s32.totalorder %s19, 0
      %p114 = por %p112, %p113
      %s115 = ssub.s32 %s13, %s20
      %p116 = scmp.eq.s32.totalorder %s115, 0
      %s118 = sadd.s32 %s117, 1
      %s119 = scalar_select %p116, %s117, %s118
      %p122 = pneg %p116
      %p123 = scmp.eq.s32.totalorder %s13, 1
      %p124 = por %p122, %p123
      %p125 = scmp.ne.s32.totalorder %s117, %s120
      %p126 = scmp.eq.s32.totalorder %s13, 0
      %p127 = por %p125, %p126
      %p128 = scmp.ne.s32.totalorder %s117, %s120
      %p129 = scmp.eq.s32.totalorder %s18, 1
      %p130 = por %p128, %p129
      %p131 = scmp.ne.s32.totalorder %s120, %s121
      %p132 = scmp.eq.s32.totalorder %s18, 0
      %p133 = por %p131, %p132
      %p134 = scmp.ne.s32.totalorder %s120, %s121
      %p135 = scmp.eq.s32.totalorder %s19, 1
      %p136 = por %p134, %p135
      %p138 = scmp.ne.s32.totalorder %s121, %s137
      %p139 = scmp.eq.s32.totalorder %s19, 0
      %p140 = por %p138, %p139
      %p141 = scmp.le.s32.totalorder 1, %s13
      %p142 = scmp.lt.s32.totalorder %s13, 3
      %p143 = pnand %p141, %p142
      %p144 = pneg %p143
      // Predicated region
      $region9: #{tpu_custom_call.1} parent=5 // pred_check
        _
      $region10: #{tpu_custom_call.1} parent=5 // pred_check_branch
        %146 = sbr.rel (%p143) target = $region12
      $region11: #{tpu_custom_call.1} parent=5 // pred_region
        %s147 = ssub.s32 %s13, 1
        // Predicated region
        $region13: #{tpu_custom_call.1} parent=11 // pred_check
          %p148 = pneg %p86
        $region14: #{tpu_custom_call.1} parent=11 // pred_check_branch
          %150 = sbr.rel (%p148) target = $region16
        $region15: #{tpu_custom_call.1} parent=11 // pred_region
          _
        $region16: #{tpu_custom_call.1} parent=11 // pred_fallthru
          _
        // Predicated region
        $region17: #{tpu_custom_call.1} parent=11 // pred_check
          %p151 = pneg %p107
        $region18: #{tpu_custom_call.1} parent=11 // pred_check_branch
          %153 = sbr.rel (%p151) target = $region20
        $region19: #{tpu_custom_call.1} parent=11 // pred_region
          _
        $region20: #{tpu_custom_call.1} parent=11 // pred_fallthru
          _
      $region12: #{tpu_custom_call.1} parent=5 // pred_fallthru
        _
      %p154 = scmp.lt.s32.totalorder %s13, 2
      // Predicated region
      $region21: #{tpu_custom_call.1} parent=5 // pred_check
        %p155 = pneg %p154
      $region22: #{tpu_custom_call.1} parent=5 // pred_check_branch
        %157 = sbr.rel (%p155) target = $region24
      $region23: #{tpu_custom_call.1} parent=5 // pred_region
        // Predicated region
        $region25: #{tpu_custom_call.1} parent=23 // pred_check
          %p158 = pneg %p33
        $region26: #{tpu_custom_call.1} parent=23 // pred_check_branch
          %160 = sbr.rel (%p158) target = $region28
        $region27: #{tpu_custom_call.1} parent=23 // pred_region
          %p161 = scmp.lt.s32.totalorder %s13, 1
          %s162 = scalar_select %p161, %s13, 1
          %s163 = scalar_lea.vmem %s0, %s162
        $region28: #{tpu_custom_call.1} parent=23 // pred_fallthru
          _
        // Predicated region
        $region29: #{tpu_custom_call.1} parent=23 // pred_check
          %p164 = pneg %p59
        $region30: #{tpu_custom_call.1} parent=23 // pred_check_branch
          %166 = sbr.rel (%p164) target = $region32
        $region31: #{tpu_custom_call.1} parent=23 // pred_region
          %p167 = scmp.lt.s32.totalorder %s13, 1
          %s168 = scalar_select %p167, %s13, 1
          %s169 = smul.addr %s168, 2
          %s170 = smul.addr %s169, 4
          %s171 = scalar_lea.vmem %s1, %s170
        $region32: #{tpu_custom_call.1} parent=23 // pred_fallthru
          _
      $region24: #{tpu_custom_call.1} parent=5 // pred_fallthru
        _
      %p172 = scmp.le.s32.totalorder 1, %s13
      %p173 = scmp.lt.s32.totalorder %s13, 3
      %p174 = pnand %p172, %p173
      %p175 = pneg %p174
      // Predicated region
      $region33: #{tpu_custom_call.1} parent=5 // pred_check
        _
      $region34: #{tpu_custom_call.1} parent=5 // pred_check_branch
        %177 = sbr.rel (%p174) target = $region36
      $region35: #{tpu_custom_call.1} parent=5 // pred_region
        %s178 = ssub.s32 %s13, 1
        %p179 = scmp.lt.s32.totalorder %s18, 1
        %s180 = scalar_select %p179, %s18, 1
        %s181 = scalar_lea.vmem %s0, %s180
        %p182 = pneg %p39
        %p183 = pneg %p36
        %p184 = scmp.lt.s32.totalorder %s18, 1
        %s185 = scalar_select %p184, %s18, 1
        %s186 = smul.addr %s185, 2
        %s187 = smul.addr %s186, 4
        %s188 = scalar_lea.vmem %s1, %s187
        %p189 = pneg %p65
        %p190 = pneg %p62
        %p191 = pneg %p86
        %p192 = pneg %p83
        %p193 = pneg %p107
        %p194 = pneg %p104
        %p195 = pneg %p133
        %p196 = pneg %p130
        %s197 = sand.u32 %s120, 1
        %s198 = scalar_lea.sflag [#allocation3], %s197
        %s199 = sand.u32 %s120, 1
        %s200 = scalar_lea.vmem [#allocation2], %s199
        %p201 = scmp.lt.s32.totalorder %s18, 1
        %s202 = scalar_select %p201, %s18, 1
        %s203 = scalar_lea.vmem %s0, %s202
        %p204 = scmp.lt.s32.totalorder %s18, 1
        %s205 = scalar_select %p204, %s18, 1
        %s206 = smul.addr %s205, 2
        %s207 = smul.addr %s206, 4
        %s208 = scalar_lea.vmem %s1, %s207
        %v209 = vld [vmem:[%s203] sm:$0x1]
        %vm210 = vcmp.gt.s32.totalorder %v209, 1
        %v211 = vsel %vm210, %v209, 1
        %v212 = vcvt.s32.f32 %v211
        %v213 = vrcp.pop %v212
        %v214 = vmul.f32 1.0, %v213
        %v215 = vlaneseq
        %v216 = vshrl.u32 %v215, 7
        %v217 = vadd.s32 %v216, 8
        %v218 = vlaneseq
        %v219 = vshrl.u32 %v218, 7
        %v220 = vsub.s32 0, %v219
        %v221 = vrot.slane %v209, %v220
        %vm222 = vcmp.lt.s32.totalorder %v216, %v221
        %vm223 = vcmp.lt.s32.totalorder %v217, %v221
        %v225 = vlaneseq
        %v226 = vshrl.u32 %v225, 7
        %v227 = vsub.s32 0, %v226
        %v228 = vrot.slane %v214, %v227
        %v230 = vsel %vm222, %v228, 0.0
        %v231 = vsel %vm223, %v228, 0.0
        %v232 = vld [vmem:[%s208] sm:$0xf]
        %v233 = vld [vmem:[%s208 + $0x4] sm:$0xf]
        %v234 = vunpack.c.l.bf16 %v232
        %v235 = vunpack.c.l.bf16 %v233
        %237 = vset.pattern.permute.xlu0 0
        %238 = vperm.xlu0 %237, %v230
        %v239 = vpop.permute.xlu0 %238
        %242 = vset.pattern.permute.xlu0 0
        %243 = vperm.xlu0 %242, %v231
        %v244 = vpop.permute.xlu0 %243
        %v246 = vmul.f32 %v234, %v239
        %v247 = vmul.f32 %v235, %v244
        %v248 = vadd.f32 %v246, %v247
        %v249 = vrot.slane %v248, 4
        %v250 = vadd.f32 %v248, %v249
        %v251 = vrot.slane %v250, 2
        %v252 = vadd.f32 %v250, %v251
        %v253 = vrot.slane %v252, 1
        %v254 = vadd.f32 %v252, %v253
        %v255 = vld [vmem:[%s2] sm:$0xff]
        %v256 = vld [vmem:[%s2 + $0x8] sm:$0xff]
        %v257 = vld [vmem:[%s2 + $0x10] sm:$0xff]
        %v258 = vld [vmem:[%s2 + $0x18] sm:$0xff]
        %v259 = vld [vmem:[%s2 + $0x20] sm:$0xff]
        %v260 = vld [vmem:[%s2 + $0x28] sm:$0xff]
        %v261 = vld [vmem:[%s2 + $0x30] sm:$0xff]
        %v262 = vld [vmem:[%s2 + $0x38] sm:$0xff]
        %v263 = vld [vmem:[%s2 + $0x40] sm:$0xff]
        %v264 = vld [vmem:[%s2 + $0x48] sm:$0xff]
        %v265 = vld [vmem:[%s2 + $0x50] sm:$0xff]
        %v266 = vld [vmem:[%s2 + $0x58] sm:$0xff]
        %v267 = vld [vmem:[%s2 + $0x60] sm:$0xff]
        %v268 = vld [vmem:[%s2 + $0x68] sm:$0xff]
        %v269 = vld [vmem:[%s2 + $0x70] sm:$0xff]
        %v270 = vld [vmem:[%s2 + $0x78] sm:$0xff]
        %v271 = vld [vmem:[%s3] sm:$0x1]
        %272 = vmatprep.subr.mxu0 0.0
        %273 = vmatpush1.msra.mxu0 %v255
        %274 = vmatprep.subr.mxu0 0.0
        %275 = vmatpush1.msra.mxu0 %v256
        %276 = vmatprep.subr.mxu0 0.0
        %277 = vmatpush1.msra.mxu0 %v257
        %278 = vmatprep.subr.mxu0 0.0
        %279 = vmatpush1.msra.mxu0 %v258
        %280 = vmatprep.subr.mxu0 0.0
        %281 = vmatpush1.msra.mxu0 %v259
        %282 = vmatprep.subr.mxu0 0.0
        %283 = vmatpush1.msra.mxu0 %v260
        %284 = vmatprep.subr.mxu0 0.0
        %285 = vmatpush1.msra.mxu0 %v261
        %286 = vmatprep.subr.mxu0 0.0
        %287 = vmatpush1.msra.mxu0 %v262
        %288 = vmatprep.subr.mxu0 0.0
        %289 = vmatpush1.msra.mxu0 %v263
        %290 = vmatprep.subr.mxu0 0.0
        %291 = vmatpush1.msra.mxu0 %v264
        %292 = vmatprep.subr.mxu0 0.0
        %293 = vmatpush1.msra.mxu0 %v265
        %294 = vmatprep.subr.mxu0 0.0
        %295 = vmatpush1.msra.mxu0 %v266
        %296 = vmatprep.subr.mxu0 0.0
        %297 = vmatpush1.msra.mxu0 %v267
        %298 = vmatprep.subr.mxu0 0.0
        %299 = vmatpush1.msra.mxu0 %v268
        %300 = vmatprep.subr.mxu0 0.0
        %301 = vmatpush1.msra.mxu0 %v269
        %302 = vmatprep.subr.mxu0 0.0
        %303 = vmatpush1.msra.mxu0 %v270
        %304 = vmatprep.subr.mxu0 0.0
        %305 = vmatpush1.msra.mxu0 0.0
        %306 = vmatprep.subr.mxu0 0.0
        %307 = vmatpush1.msra.mxu0 0.0
        %308 = vmatprep.subr.mxu0 0.0
        %309 = vmatpush1.msra.mxu0 0.0
        %310 = vmatprep.subr.mxu0 0.0
        %311 = vmatpush1.msra.mxu0 0.0
        %312 = vmatprep.subr.mxu0 0.0
        %313 = vmatpush1.msra.mxu0 0.0
        %314 = vmatprep.subr.mxu0 0.0
        %315 = vmatpush1.msra.mxu0 0.0
        %316 = vmatprep.subr.mxu0 0.0
        %317 = vmatpush1.msra.mxu0 0.0
        %318 = vmatprep.subr.mxu0 0.0
        %319 = vmatpush1.msra.mxu0 0.0
        %320 = vmatprep.subr.mxu0 0.0
        %321 = vmatpush1.msra.mxu0 0.0
        %322 = vmatprep.subr.mxu0 0.0
        %323 = vmatpush1.msra.mxu0 0.0
        %324 = vmatprep.subr.mxu0 0.0
        %325 = vmatpush1.msra.mxu0 0.0
        %326 = vmatprep.subr.mxu0 0.0
        %327 = vmatpush1.msra.mxu0 0.0
        %328 = vmatprep.subr.mxu0 0.0
        %329 = vmatpush1.msra.mxu0 0.0
        %330 = vmatprep.subr.mxu0 0.0
        %331 = vmatpush1.msra.mxu0 0.0
        %332 = vmatprep.subr.mxu0 0.0
        %333 = vmatpush1.msra.mxu0 0.0
        %334 = vmatprep.subr.mxu0 0.0
        %335 = vmatpush1.msra.mxu0 0.0
        %336 = vmatprep.mubr.f32.mxu0 0.0
        %337 = vmatmul.mubr.f32.gmra.mrb[0].mxu0 %v254
        %v338 = vpop.f32.mrb[0].mxu0
        %v339 = vadd.f32 %v271, %v338
        %v340 = vpop.f32.mrb[0].mxu0
        %341 = vdwg.mxu0
        %vm342 = vcmask 57344
        %343 = vst.msk [vmem:[%s200] sm:$0x1] %vm342, %v339
        %s344 = sand.u32 %s120, 1
        %s345 = scalar_lea.sflag [#allocation3], %s344
        %s346 = sand.u32 %s120, 1
        %s347 = scalar_lea.vmem [#allocation2], %s346
        // Predicated region
        $region37: #{tpu_custom_call.1} parent=35 // pred_check
          %p348 = pneg %p130
        $region38: #{tpu_custom_call.1} parent=35 // pred_check_branch
          %350 = sbr.rel (%p348) target = $region40
        $region39: #{tpu_custom_call.1} parent=35 // pred_region
          %s352 = ssub.s32 16, 16
          %353 = vsyncadd %s345, %s352
          %s354 = smul.addr %s18, 16
          %s355 = scalar_lea.hbm %s4, %s354
          %s357 = sshll.u32 %s347, 4
          %s358 = int_to_ptr.vmem [resolvable:$true] %s357
          %360 = dma.vmem_to_hbm [thread:$0]  %s358, 16, %s355, %s345
        $region40: #{tpu_custom_call.1} parent=35 // pred_fallthru
          _
      $region36: #{tpu_custom_call.1} parent=5 // pred_fallthru
        _
      %p361 = scmp.le.s32.totalorder 2, %s13
      // Predicated region
      $region41: #{tpu_custom_call.1} parent=5 // pred_check
        %p362 = pneg %p361
      $region42: #{tpu_custom_call.1} parent=5 // pred_check_branch
        %364 = sbr.rel (%p362) target = $region44
      $region43: #{tpu_custom_call.1} parent=5 // pred_region
        %s365 = ssub.s32 %s13, 2
        // Predicated region
        $region45: #{tpu_custom_call.1} parent=43 // pred_check
          %p366 = pneg %p136
        $region46: #{tpu_custom_call.1} parent=43 // pred_check_branch
          %368 = sbr.rel (%p366) target = $region48
        $region47: #{tpu_custom_call.1} parent=43 // pred_region
          %s369 = sand.u32 %s121, 1
          %s370 = scalar_lea.sflag [#allocation3], %s369
          %s371 = sand.u32 %s121, 1
          %s372 = scalar_lea.vmem [#allocation2], %s371
          %373 = dma.done %s370, 16
        $region48: #{tpu_custom_call.1} parent=43 // pred_fallthru
          _
      $region44: #{tpu_custom_call.1} parent=5 // pred_fallthru
        _
    $region6: #{tpu_custom_call.1} parent=1 // loop_footer
      %s17 = sadd.s32 1, %s13
    $region7: #{tpu_custom_call.1} parent=1 // loop_footer_branch
      %12 = sbr.rel target = $region3
    $region8: #{tpu_custom_call.1} parent=1 // loop_exit
      _
    %374 = vsyncpa [#allocation3], 1
    %s375 = scalar_lea.sflag [#allocation3], 1
    %376 = vsyncpa %s375, 1

</llo_original>
